<compile_context>
chip_gen: v7x
topology: tpu7x:2x2x1
jax: 0.10.0
libtpu: 0.0.40
codegen_flags: <defaults>
</compile_context>

<pallas_src>
import jax
import jax.numpy as jnp
from jax.experimental import pallas as pl
from jax.experimental.pallas import tpu as pltpu

EPS = 1e-5


def batchnorm1d_kernel(x_ref, gamma_ref, beta_ref, o_ref):
    """Normalize one (N, TC) channel tile using batch statistics.

    Two-pass (centered) statistics accumulated in f32, then the affine is
    folded into a per-channel scale/shift so the final write is a single
    multiply-add over a re-read of x_ref (no persistent f32 copy of x)."""
    n = x_ref.shape[0]
    inv_n = 1.0 / n
    mean = jnp.sum(x_ref[...].astype(jnp.float32), axis=0, keepdims=True) * inv_n
    centered = x_ref[...].astype(jnp.float32) - mean
    var = jnp.sum(centered * centered, axis=0, keepdims=True) * inv_n  # biased
    inv_std = jax.lax.rsqrt(var + EPS)
    scale = inv_std * gamma_ref[...]          # (1, TC)
    shift = beta_ref[...] - mean * scale      # (1, TC)
    o_ref[...] = (x_ref[...].astype(jnp.float32) * scale + shift).astype(o_ref.dtype)


def _vmem_sizes():
    """Return (tile_budget_bytes, vmem_limit_bytes), generation-aware."""
    try:
        physical = int(pltpu.get_tpu_info().vmem_capacity_bytes)
    except Exception:
        physical = 64 << 20  # conservative: v7x per-core VMEM
    # ~40% of physical for pipelined blocks + working set, capped at 48 MiB
    # (v5e/v6e: ~48 of 128 MiB; v7x: ~25 of 64 MiB per core).
    budget = min(max((physical * 2) // 5, 16 << 20), 48 << 20)
    limit = min((physical * 3) // 4, 96 << 20)
    return budget, limit


def _choose_channel_tile(n, c, in_itemsize, out_itemsize, budget_bytes):
    """Largest lane-dense (multiple-of-128) channel tile such that
    (a) double-buffered in/out DMA blocks (native dtype) plus an f32 compute
        working set fit the VMEM budget, and
    (b) there are >=2 grid steps when C > 128 (so the 'parallel' axis can be
        split across v7x's two TensorCores)."""
    if c <= 128:
        return c
    # Per-column VMEM bytes: 2x double-buffered input + 2x output blocks in
    # their native dtypes + ~2 f32 block-sized working sets for compute.
    per_col = n * (2 * in_itemsize + 2 * out_itemsize + 8)
    max_tc = (budget_bytes // max(per_col, 1)) // 128 * 128
    # Cap so that cdiv(c, tc) >= 2.
    half_cap = pl.cdiv(pl.cdiv(c, 2), 128) * 128
    cap = max(128, min(max_tc, half_cap))
    # Prefer an exact divisor of C (no masked edge tile); otherwise take the
    # largest lane-dense tile and let cdiv produce a ragged final tile.
    for tc in range(cap, 0, -128):
        if c % tc == 0:
            return tc
    return cap


def batchnorm1d(x, gamma, beta):
    """Training-mode BatchNorm1d forward. x: (N, C); gamma, beta: (C,)."""
    n, c = x.shape
    budget, vmem_limit = _vmem_sizes()
    in_sz = jnp.dtype(x.dtype).itemsize
    tc = _choose_channel_tile(n, c, in_sz, in_sz, budget)
    grid = (pl.cdiv(c, tc),)
    # TODO(synk): a batch-tiled two-pass path (accumulate sum / sum-sq across a
    # batch grid axis) is needed once an (N, 128) column block alone exceeds
    # the VMEM budget (N ~ 100K+ f32); not implemented here.

    gamma2d = gamma.reshape(1, c).astype(jnp.float32)
    beta2d = beta.reshape(1, c).astype(jnp.float32)

    cost = pl.CostEstimate(
        flops=7 * n * c,
        transcendentals=c,
        bytes_accessed=2 * n * c * in_sz + 2 * c * 4,
    )

    return pl.pallas_call(
        batchnorm1d_kernel,
        out_shape=jax.ShapeDtypeStruct((n, c), x.dtype),
        grid_spec=pl.GridSpec(
            grid=grid,
            in_specs=[
                pl.BlockSpec((n, tc), lambda j: (0, j)),
                pl.BlockSpec((1, tc), lambda j: (0, j)),
                pl.BlockSpec((1, tc), lambda j: (0, j)),
            ],
            out_specs=pl.BlockSpec((n, tc), lambda j: (0, j)),
        ),
        compiler_params=pltpu.CompilerParams(
            # Channel tiles are independent -> shardable across TensorCores.
            dimension_semantics=("parallel",),
            vmem_limit_bytes=int(vmem_limit),
        ),
        cost_estimate=cost,
    )(x, gamma2d, beta2d)


if __name__ == "__main__":
    # Small shapes consistent with BatchNorm1d over (N, C=input_len) inputs.
    N, C = 8, 256
    key = jax.random.PRNGKey(0)
    x = jax.random.normal(key, (N, C), dtype=jnp.float32)

    # Deterministic parameter init matching torch.nn.BatchNorm1d defaults.
    gamma = jnp.ones((C,), dtype=jnp.float32)  # weight
    beta = jnp.zeros((C,), dtype=jnp.float32)  # bias

    out = batchnorm1d(x, gamma, beta)
    out = jax.block_until_ready(out)

    # Reference check in plain JAX (training-mode batch norm semantics).
    mean = jnp.mean(x, axis=0, keepdims=True)
    var = jnp.mean((x - mean) ** 2, axis=0, keepdims=True)
    ref = (x - mean) / jnp.sqrt(var + EPS) * gamma + beta
    assert jnp.allclose(out, ref, atol=1e-5, rtol=1e-5), "mismatch vs reference"

    print("KERNEL_OK")
</pallas_src>

<mosaic_0001>
module attributes {stable_mosaic.version = 11 : i64} {
  func.func @batchnorm1d_kernel(%arg0: i32, %arg1: memref<8x128xf32, #tpu.memory_space<vmem>>, %arg2: memref<1x128xf32, #tpu.memory_space<vmem>>, %arg3: memref<1x128xf32, #tpu.memory_space<vmem>>, %arg4: memref<8x128xf32, #tpu.memory_space<vmem>>) attributes {dimension_semantics = [#tpu.dimension_semantics<parallel>], iteration_bounds = array<i64: 2>, scalar_prefetch = 0 : i64, scratch_operands = 0 : i64, tpu.core_type = #tpu.core_type<tc>, window_params = [{transform_indices = @transform_0, window_bounds = array<i64: 8, 128>}, {transform_indices = @transform_1, window_bounds = array<i64: 1, 128>}, {transform_indices = @transform_2, window_bounds = array<i64: 1, 128>}, {transform_indices = @transform_3, window_bounds = array<i64: 8, 128>}]} {
    %c0 = arith.constant 0 : index
    %c0_0 = arith.constant 0 : index
    %0 = vector.load %arg1[%c0, %c0_0] : memref<8x128xf32, #tpu.memory_space<vmem>>, vector<8x128xf32>
    %cst = arith.constant dense<0.000000e+00> : vector<128xf32>
    %1 = vector.multi_reduction <add>, %0, %cst [0] : vector<8x128xf32> to vector<128xf32>
    %2 = vector.shape_cast %1 : vector<128xf32> to vector<1x128xf32>
    %cst_1 = arith.constant 1.250000e-01 : f32
    %3 = vector.broadcast %cst_1 : f32 to vector<1x128xf32>
    %4 = arith.mulf %2, %3 : vector<1x128xf32>
    %c0_2 = arith.constant 0 : index
    %c0_3 = arith.constant 0 : index
    %5 = vector.load %arg1[%c0_2, %c0_3] : memref<8x128xf32, #tpu.memory_space<vmem>>, vector<8x128xf32>
    %6 = vector.broadcast %4 : vector<1x128xf32> to vector<8x128xf32>
    %7 = arith.subf %5, %6 : vector<8x128xf32>
    %8 = arith.mulf %7, %7 : vector<8x128xf32>
    %cst_4 = arith.constant dense<0.000000e+00> : vector<128xf32>
    %9 = vector.multi_reduction <add>, %8, %cst_4 [0] : vector<8x128xf32> to vector<128xf32>
    %10 = vector.shape_cast %9 : vector<128xf32> to vector<1x128xf32>
    %cst_5 = arith.constant 1.250000e-01 : f32
    %11 = vector.broadcast %cst_5 : f32 to vector<1x128xf32>
    %12 = arith.mulf %10, %11 : vector<1x128xf32>
    %cst_6 = arith.constant 9.99999974E-6 : f32
    %13 = vector.broadcast %cst_6 : f32 to vector<1x128xf32>
    %14 = arith.addf %12, %13 : vector<1x128xf32>
    %15 = math.rsqrt %14 : vector<1x128xf32>
    %c0_7 = arith.constant 0 : index
    %c0_8 = arith.constant 0 : index
    %16 = vector.load %arg2[%c0_7, %c0_8] : memref<1x128xf32, #tpu.memory_space<vmem>>, vector<1x128xf32>
    %17 = arith.mulf %15, %16 : vector<1x128xf32>
    %c0_9 = arith.constant 0 : index
    %c0_10 = arith.constant 0 : index
    %18 = vector.load %arg3[%c0_9, %c0_10] : memref<1x128xf32, #tpu.memory_space<vmem>>, vector<1x128xf32>
    %19 = arith.mulf %4, %17 : vector<1x128xf32>
    %20 = arith.subf %18, %19 : vector<1x128xf32>
    %c0_11 = arith.constant 0 : index
    %c0_12 = arith.constant 0 : index
    %21 = vector.load %arg1[%c0_11, %c0_12] : memref<8x128xf32, #tpu.memory_space<vmem>>, vector<8x128xf32>
    %22 = vector.broadcast %17 : vector<1x128xf32> to vector<8x128xf32>
    %23 = arith.mulf %21, %22 : vector<8x128xf32>
    %24 = vector.broadcast %20 : vector<1x128xf32> to vector<8x128xf32>
    %25 = arith.addf %23, %24 : vector<8x128xf32>
    %c0_13 = arith.constant 0 : index
    %c0_14 = arith.constant 0 : index
    %26 = vector.load %arg4[%c0_13, %c0_14] : memref<8x128xf32, #tpu.memory_space<vmem>>, vector<8x128xf32>
    tpu.vector_store %arg4[%c0_13, %c0_14], %25 {strides = array<i32>} : memref<8x128xf32, #tpu.memory_space<vmem>>, vector<8x128xf32>,
    return
  }
  func.func @transform_0(%arg0: i32) -> (i32, i32) {
    %c0_i32 = arith.constant 0 : i32
    %c0_i32_0 = arith.constant 0 : i32
    return %c0_i32, %arg0 : i32, i32
  }
  func.func @transform_1(%arg0: i32) -> (i32, i32) {
    %c0_i32 = arith.constant 0 : i32
    %c0_i32_0 = arith.constant 0 : i32
    return %c0_i32, %arg0 : i32, i32
  }
  func.func @transform_2(%arg0: i32) -> (i32, i32) {
    %c0_i32 = arith.constant 0 : i32
    %c0_i32_0 = arith.constant 0 : i32
    return %c0_i32, %arg0 : i32, i32
  }
  func.func @transform_3(%arg0: i32) -> (i32, i32) {
    %c0_i32 = arith.constant 0 : i32
    %c0_i32_0 = arith.constant 0 : i32
    return %c0_i32, %arg0 : i32, i32
  }
}

</mosaic_0001>

<llo_original>
// kernel: tpu_custom_call.1
$region0: #{tpu_custom_call.1}
  #allocation0 [shape = 'u32[]', space=smem, size = 0x4, offset = 0x4, fixed_abs, tag = 'smem constant byte address 0x4 - core index']
  #allocation1 [shape = 'u32[144,128]{1,0:T(1,128)}', space=vmem, size = 0x12000, scoped, tag = 'internal scratch']
  %s0 = inlined_call_operand.hbm [shape: f32[8,256], index: 0, kind: input, shape index: {}]
  %s1 = inlined_call_operand.vmem [shape: f32[1,256], index: 1, kind: input, shape index: {}]
  %s2 = inlined_call_operand.vmem [shape: f32[1,256], index: 2, kind: input, shape index: {}]
  %s3 = inlined_call_operand.hbm [shape: f32[8,256], index: 3, kind: output, shape index: {}]
  %s4 = sld [smem:[#allocation0]]
  $region49: #{tpu_custom_call.1} parent=0
    _
  %s6 = ssub.s32 1, %s4
  %s7 = scalar_select 0, %s6, %s4
  $region1: #{tpu_custom_call.1} parent=0
    #allocation2 [shape = 'u8[8192]{0}', space=vmem, size = 0x2000, scoped, tag = 'input window, operand 0']
    #allocation3 [shape = 's32[2]{0}', space=sflag, size = 0x8, scoped, tag = 'scoped memory for tpu_custom_call.1']
    #allocation4 [shape = 's32[2]{0}', space=sflag, size = 0x8, scoped, tag = 'scoped memory for tpu_custom_call.1']
    #allocation5 [shape = 'u8[8192]{0}', space=vmem, size = 0x2000, scoped, tag = 'output window, operand 0']
    %8 = vsyncpa [#allocation3], 0
    %s9 = scalar_lea.sflag [#allocation3], 1
    %10 = vsyncpa %s9, 0
    %11 = vsyncpa [#allocation4], 0
    %s12 = scalar_lea.sflag [#allocation4], 1
    %13 = vsyncpa %s12, 0
    loop: start=0, step=1, limit=4
    $region2: #{tpu_custom_call.1} parent=1 // loop_pre_header
      _
    $region3: #{tpu_custom_call.1} parent=1 // loop_header
      %s15 = sphi 0, %s19
      %p16 = scmp.ge.s32.totalorder %s15, 4
      %s25 = sphi 0, %s27
      %s28 = sphi 0, %s25
      %s29 = sphi 0, %s28
      %s45 = sphi 0, %s29
      %s51 = sphi 0, %s53
      %s54 = sphi 0, %s51
      %s55 = sphi 0, %s54
      %s71 = sphi 0, %s55
      %s77 = sphi 0, %s79
      %s80 = sphi 0, %s77
      %s81 = sphi 0, %s80
      %s97 = sphi 0, %s81
      %s103 = sphi 0, %s105
      %s106 = sphi 0, %s103
      %s107 = sphi 0, %s106
      %s123 = sphi 0, %s107
    $region4: #{tpu_custom_call.1} parent=1 // loop_header_branch
      %18 = sbr.rel (%p16) target = $region8
    $region5: #{tpu_custom_call.1} parent=1 // loop_body
      %s20 = ssub.s32 %s15, 1
      %s21 = ssub.s32 %s15, 2
      %s22 = sadd.s32 %s15, 1
      %s23 = ssub.s32 %s15, %s22
      %p24 = scmp.eq.s32.totalorder %s23, 0
      %s26 = sadd.s32 %s25, 1
      %s27 = scalar_select %p24, %s25, %s26
      %p30 = pneg %p24
      %p31 = scmp.eq.s32.totalorder %s15, 1
      %p32 = por %p30, %p31
      %p33 = scmp.ne.s32.totalorder %s25, %s28
      %p34 = scmp.eq.s32.totalorder %s15, 0
      %p35 = por %p33, %p34
      %p36 = scmp.ne.s32.totalorder %s25, %s28
      %p37 = scmp.eq.s32.totalorder %s20, 1
      %p38 = por %p36, %p37
      %p39 = scmp.ne.s32.totalorder %s28, %s29
      %p40 = scmp.eq.s32.totalorder %s20, 0
      %p41 = por %p39, %p40
      %p42 = scmp.ne.s32.totalorder %s28, %s29
      %p43 = scmp.eq.s32.totalorder %s21, 1
      %p44 = por %p42, %p43
      %p46 = scmp.ne.s32.totalorder %s29, %s45
      %p47 = scmp.eq.s32.totalorder %s21, 0
      %p48 = por %p46, %p47
      %s49 = ssub.s32 %s15, %s22
      %p50 = scmp.eq.s32.totalorder %s49, 0
      %s52 = sadd.s32 %s51, 1
      %s53 = scalar_select %p50, %s51, %s52
      %p56 = pneg %p50
      %p57 = scmp.eq.s32.totalorder %s15, 1
      %p58 = por %p56, %p57
      %p59 = scmp.ne.s32.totalorder %s51, %s54
      %p60 = scmp.eq.s32.totalorder %s15, 0
      %p61 = por %p59, %p60
      %p62 = scmp.ne.s32.totalorder %s51, %s54
      %p63 = scmp.eq.s32.totalorder %s20, 1
      %p64 = por %p62, %p63
      %p65 = scmp.ne.s32.totalorder %s54, %s55
      %p66 = scmp.eq.s32.totalorder %s20, 0
      %p67 = por %p65, %p66
      %p68 = scmp.ne.s32.totalorder %s54, %s55
      %p69 = scmp.eq.s32.totalorder %s21, 1
      %p70 = por %p68, %p69
      %p72 = scmp.ne.s32.totalorder %s55, %s71
      %p73 = scmp.eq.s32.totalorder %s21, 0
      %p74 = por %p72, %p73
      %s75 = ssub.s32 %s15, %s22
      %p76 = scmp.eq.s32.totalorder %s75, 0
      %s78 = sadd.s32 %s77, 1
      %s79 = scalar_select %p76, %s77, %s78
      %p82 = pneg %p76
      %p83 = scmp.eq.s32.totalorder %s15, 1
      %p84 = por %p82, %p83
      %p85 = scmp.ne.s32.totalorder %s77, %s80
      %p86 = scmp.eq.s32.totalorder %s15, 0
      %p87 = por %p85, %p86
      %p88 = scmp.ne.s32.totalorder %s77, %s80
      %p89 = scmp.eq.s32.totalorder %s20, 1
      %p90 = por %p88, %p89
      %p91 = scmp.ne.s32.totalorder %s80, %s81
      %p92 = scmp.eq.s32.totalorder %s20, 0
      %p93 = por %p91, %p92
      %p94 = scmp.ne.s32.totalorder %s80, %s81
      %p95 = scmp.eq.s32.totalorder %s21, 1
      %p96 = por %p94, %p95
      %p98 = scmp.ne.s32.totalorder %s81, %s97
      %p99 = scmp.eq.s32.totalorder %s21, 0
      %p100 = por %p98, %p99
      %s101 = ssub.s32 %s15, %s22
      %p102 = scmp.eq.s32.totalorder %s101, 0
      %s104 = sadd.s32 %s103, 1
      %s105 = scalar_select %p102, %s103, %s104
      %p108 = pneg %p102
      %p109 = scmp.eq.s32.totalorder %s15, 1
      %p110 = por %p108, %p109
      %p111 = scmp.ne.s32.totalorder %s103, %s106
      %p112 = scmp.eq.s32.totalorder %s15, 0
      %p113 = por %p111, %p112
      %p114 = scmp.ne.s32.totalorder %s103, %s106
      %p115 = scmp.eq.s32.totalorder %s20, 1
      %p116 = por %p114, %p115
      %p117 = scmp.ne.s32.totalorder %s106, %s107
      %p118 = scmp.eq.s32.totalorder %s20, 0
      %p119 = por %p117, %p118
      %p120 = scmp.ne.s32.totalorder %s106, %s107
      %p121 = scmp.eq.s32.totalorder %s21, 1
      %p122 = por %p120, %p121
      %p124 = scmp.ne.s32.totalorder %s107, %s123
      %p125 = scmp.eq.s32.totalorder %s21, 0
      %p126 = por %p124, %p125
      %p127 = scmp.le.s32.totalorder 1, %s15
      %p128 = scmp.lt.s32.totalorder %s15, 3
      %p129 = pnand %p127, %p128
      %p130 = pneg %p129
      // Predicated region
      $region9: #{tpu_custom_call.1} parent=5 // pred_check
        _
      $region10: #{tpu_custom_call.1} parent=5 // pred_check_branch
        %132 = sbr.rel (%p129) target = $region12
      $region11: #{tpu_custom_call.1} parent=5 // pred_region
        %s133 = ssub.s32 %s15, 1
      $region12: #{tpu_custom_call.1} parent=5 // pred_fallthru
        _
      %p134 = scmp.lt.s32.totalorder %s15, 2
      // Predicated region
      $region13: #{tpu_custom_call.1} parent=5 // pred_check
        %p135 = pneg %p134
      $region14: #{tpu_custom_call.1} parent=5 // pred_check_branch
        %137 = sbr.rel (%p135) target = $region16
      $region15: #{tpu_custom_call.1} parent=5 // pred_region
        // Predicated region
        $region17: #{tpu_custom_call.1} parent=15 // pred_check
          %p138 = pneg %p35
        $region18: #{tpu_custom_call.1} parent=15 // pred_check_branch
          %140 = sbr.rel (%p138) target = $region20
        $region19: #{tpu_custom_call.1} parent=15 // pred_region
          %s141 = sand.u32 %s25, 1
          %s142 = scalar_lea.sflag [#allocation3], %s141
          %s143 = sand.u32 %s25, 1
          %s144 = smul.addr %s143, 8
          %s145 = scalar_lea.vmem [#allocation2], %s144
          %s147 = ssub.s32 128, 128
          %148 = vsyncadd %s142, %s147
          %s149 = smul.addr %s15, 128
          %s150 = scalar_lea.hbm %s0, %s149
          %s152 = sshll.u32 %s145, 4
          %s153 = int_to_ptr.vmem [resolvable:$true] %s152
          %155 = dma.hbm_to_vmem [thread:$0]  %s150, 128, %s153, %s142
        $region20: #{tpu_custom_call.1} parent=15 // pred_fallthru
          _
        // Predicated region
        $region21: #{tpu_custom_call.1} parent=15 // pred_check
          %p156 = pneg %p61
        $region22: #{tpu_custom_call.1} parent=15 // pred_check_branch
          %158 = sbr.rel (%p156) target = $region24
        $region23: #{tpu_custom_call.1} parent=15 // pred_region
          %p159 = scmp.lt.s32.totalorder %s15, 1
          %s160 = scalar_select %p159, %s15, 1
          %s161 = scalar_lea.vmem %s1, %s160
        $region24: #{tpu_custom_call.1} parent=15 // pred_fallthru
          _
        // Predicated region
        $region25: #{tpu_custom_call.1} parent=15 // pred_check
          %p162 = pneg %p87
        $region26: #{tpu_custom_call.1} parent=15 // pred_check_branch
          %164 = sbr.rel (%p162) target = $region28
        $region27: #{tpu_custom_call.1} parent=15 // pred_region
          %p165 = scmp.lt.s32.totalorder %s15, 1
          %s166 = scalar_select %p165, %s15, 1
          %s167 = scalar_lea.vmem %s2, %s166
        $region28: #{tpu_custom_call.1} parent=15 // pred_fallthru
          _
      $region16: #{tpu_custom_call.1} parent=5 // pred_fallthru
        _
      %p168 = scmp.le.s32.totalorder 1, %s15
      %p169 = scmp.lt.s32.totalorder %s15, 3
      %p170 = pnand %p168, %p169
      %p171 = pneg %p170
      // Predicated region
      $region29: #{tpu_custom_call.1} parent=5 // pred_check
        _
      $region30: #{tpu_custom_call.1} parent=5 // pred_check_branch
        %173 = sbr.rel (%p170) target = $region32
      $region31: #{tpu_custom_call.1} parent=5 // pred_region
        %s174 = ssub.s32 %s15, 1
        %s175 = sand.u32 %s28, 1
        %s176 = scalar_lea.sflag [#allocation3], %s175
        %s177 = sand.u32 %s28, 1
        %s178 = smul.addr %s177, 8
        %s179 = scalar_lea.vmem [#allocation2], %s178
        // Predicated region
        $region33: #{tpu_custom_call.1} parent=31 // pred_check
          %p180 = pneg %p41
        $region34: #{tpu_custom_call.1} parent=31 // pred_check_branch
          %182 = sbr.rel (%p180) target = $region36
        $region35: #{tpu_custom_call.1} parent=31 // pred_region
          %183 = dma.done %s176, 128
        $region36: #{tpu_custom_call.1} parent=31 // pred_fallthru
          _
        %s184 = sand.u32 %s28, 1
        %s185 = scalar_lea.sflag [#allocation3], %s184
        %s186 = sand.u32 %s28, 1
        %s187 = smul.addr %s186, 8
        %s188 = scalar_lea.vmem [#allocation2], %s187
        %p189 = pneg %p41
        %p190 = pneg %p38
        %p191 = scmp.lt.s32.totalorder %s20, 1
        %s192 = scalar_select %p191, %s20, 1
        %s193 = scalar_lea.vmem %s1, %s192
        %p194 = pneg %p67
        %p195 = pneg %p64
        %p196 = scmp.lt.s32.totalorder %s20, 1
        %s197 = scalar_select %p196, %s20, 1
        %s198 = scalar_lea.vmem %s2, %s197
        %p199 = pneg %p93
        %p200 = pneg %p90
        %p201 = pneg %p119
        %p202 = pneg %p116
        %s203 = sand.u32 %s106, 1
        %s204 = scalar_lea.sflag [#allocation4], %s203
        %s205 = sand.u32 %s106, 1
        %s206 = smul.addr %s205, 8
        %s207 = scalar_lea.vmem [#allocation5], %s206
        %p208 = scmp.lt.s32.totalorder %s20, 1
        %s209 = scalar_select %p208, %s20, 1
        %s210 = scalar_lea.vmem %s1, %s209
        %p211 = scmp.lt.s32.totalorder %s20, 1
        %s212 = scalar_select %p211, %s20, 1
        %s213 = scalar_lea.vmem %s2, %s212
        %v214 = vld [vmem:[%s179] sm:$0xff]
        %v215 = vrot.slane %v214, 4
        %v216 = vadd.f32 %v214, %v215
        %v217 = vrot.slane %v216, 2
        %v218 = vadd.f32 %v216, %v217
        %v219 = vrot.slane %v218, 1
        %v220 = vadd.f32 %v218, %v219
        %v221 = vmul.f32 %v220, 0.125
        %v222 = vsub.f32 %v214, %v221
        %v223 = vmul.f32 %v222, %v222
        %v224 = vrot.slane %v223, 4
        %v225 = vadd.f32 %v223, %v224
        %v226 = vrot.slane %v225, 2
        %v227 = vadd.f32 %v225, %v226
        %v228 = vrot.slane %v227, 1
        %v229 = vadd.f32 %v227, %v228
        %v230 = vmul.f32 %v229, 0.125
        %v231 = vadd.f32 %v230, 1e-05
        %v232 = vrsqrt.pop %v231
        %v233 = vld [vmem:[%s210] sm:$0x1]
        %v234 = vmul.f32 %v232, %v233
        %v235 = vld [vmem:[%s213] sm:$0x1]
        %v236 = vmul.f32 %v221, %v234
        %v237 = vsub.f32 %v235, %v236
        %v238 = vlaneseq
        %v239 = vshrl.u32 %v238, 7
        %v240 = vsub.s32 0, %v239
        %v241 = vrot.slane %v234, %v240
        %v242 = vmul.f32 %v214, %v241
        %v244 = vlaneseq
        %v245 = vshrl.u32 %v244, 7
        %v246 = vsub.s32 0, %v245
        %v247 = vrot.slane %v237, %v246
        %v249 = vadd.f32 %v242, %v247
        %250 = vst [vmem:[%s207] sm:$0xff] %v249
        %s251 = sand.u32 %s106, 1
        %s252 = scalar_lea.sflag [#allocation4], %s251
        %s253 = sand.u32 %s106, 1
        %s254 = smul.addr %s253, 8
        %s255 = scalar_lea.vmem [#allocation5], %s254
        // Predicated region
        $region37: #{tpu_custom_call.1} parent=31 // pred_check
          %p256 = pneg %p116
        $region38: #{tpu_custom_call.1} parent=31 // pred_check_branch
          %258 = sbr.rel (%p256) target = $region40
        $region39: #{tpu_custom_call.1} parent=31 // pred_region
          %s260 = ssub.s32 128, 128
          %261 = vsyncadd %s252, %s260
          %s262 = smul.addr %s20, 128
          %s263 = scalar_lea.hbm %s3, %s262
          %s265 = sshll.u32 %s255, 4
          %s266 = int_to_ptr.vmem [resolvable:$true] %s265
          %268 = dma.vmem_to_hbm [thread:$0]  %s266, 128, %s263, %s252
        $region40: #{tpu_custom_call.1} parent=31 // pred_fallthru
          _
      $region32: #{tpu_custom_call.1} parent=5 // pred_fallthru
        _
      %p269 = scmp.le.s32.totalorder 2, %s15
      // Predicated region
      $region41: #{tpu_custom_call.1} parent=5 // pred_check
        %p270 = pneg %p269
      $region42: #{tpu_custom_call.1} parent=5 // pred_check_branch
        %272 = sbr.rel (%p270) target = $region44
      $region43: #{tpu_custom_call.1} parent=5 // pred_region
        %s273 = ssub.s32 %s15, 2
        // Predicated region
        $region45: #{tpu_custom_call.1} parent=43 // pred_check
          %p274 = pneg %p122
        $region46: #{tpu_custom_call.1} parent=43 // pred_check_branch
          %276 = sbr.rel (%p274) target = $region48
        $region47: #{tpu_custom_call.1} parent=43 // pred_region
          %s277 = sand.u32 %s107, 1
          %s278 = scalar_lea.sflag [#allocation4], %s277
          %s279 = sand.u32 %s107, 1
          %s280 = smul.addr %s279, 8
          %s281 = scalar_lea.vmem [#allocation5], %s280
          %282 = dma.done %s278, 128
        $region48: #{tpu_custom_call.1} parent=43 // pred_fallthru
          _
      $region44: #{tpu_custom_call.1} parent=5 // pred_fallthru
        _
    $region6: #{tpu_custom_call.1} parent=1 // loop_footer
      %s19 = sadd.s32 1, %s15
    $region7: #{tpu_custom_call.1} parent=1 // loop_footer_branch
      %14 = sbr.rel target = $region3
    $region8: #{tpu_custom_call.1} parent=1 // loop_exit
      _
    %283 = vsyncpa [#allocation3], 1
    %s284 = scalar_lea.sflag [#allocation3], 1
    %285 = vsyncpa %s284, 1
    %286 = vsyncpa [#allocation4], 1
    %s287 = scalar_lea.sflag [#allocation4], 1
    %288 = vsyncpa %s287, 1

</llo_original>
